<compile_context>
chip_gen: v7x
topology: tpu7x:2x2x1
jax: 0.10.0
libtpu: 0.0.40
codegen_flags: <defaults>
</compile_context>

<pallas_src>
import jax
import jax.numpy as jnp
from jax.experimental import pallas as pl
from jax.experimental.pallas import tpu as pltpu


def _round_up(n, m):
    return pl.cdiv(n, m) * m


def divisor_kernel(x_ref, w1_ref, b1_ref, w2_ref, b2_ref, o_ref):
    # x_ref : (2, TB)   batch on lanes
    # w1_ref: (20, 2)   PyTorch linear1.weight layout
    # b1_ref: (20, 1)
    # w2_ref: (20, 1)   linear2.weight transposed
    # b2_ref: (1, 1)
    # o_ref : (1, TB)
    x = x_ref[...]
    w1 = w1_ref[...]
    # Hidden layer: h[j, :] = w1[j,0]*x[0,:] + w1[j,1]*x[1,:] + b1[j]  (VPU FMAs)
    h = w1[:, 0:1] * x[0:1, :] + w1[:, 1:2] * x[1:2, :] + b1_ref[...]  # (20, TB)
    h = jnp.tanh(h)                                                    # EUP
    # Output layer: y = sum_j w2[j] * h[j, :] + b2   (sublane reduce, no MXU)
    y = jnp.sum(w2_ref[...] * h, axis=0, keepdims=True) + b2_ref[...]  # (1, TB)
    o_ref[...] = y.astype(o_ref.dtype)


def divisor_forward(x, w1, b1, w2, b2, *, tb=1024):
    """Forward pass of Divisor.

    x : (B, 2) float32
    w1: (20, 2), b1: (20,)   -- PyTorch linear1 parameters
    w2: (1, 20), b2: (1,)    -- PyTorch linear2 parameters
    returns (B, 1) float32
    """
    B = x.shape[0]
    # Batch tile: large enough to amortize the ~0.35us/grid-step overhead,
    # but never bigger than the (128-aligned) padded batch.
    tb = min(tb, _round_up(B, 128))
    b_pad = _round_up(B, tb)

    # Lane-major, zero-padded input; padded columns are sliced off afterwards.
    xt = jnp.zeros((2, b_pad), jnp.float32).at[:, :B].set(x.T)
    w1_k = w1.astype(jnp.float32)                    # (20, 2)
    b1_k = b1.reshape(20, 1).astype(jnp.float32)
    w2_k = w2.reshape(1, 20).T.astype(jnp.float32)   # (20, 1)
    b2_k = b2.reshape(1, 1).astype(jnp.float32)

    def const(shape):
        # Constant block across the batch grid: weights stay VMEM-resident.
        return pl.BlockSpec(shape, lambda i: (0,) * len(shape))

    out = pl.pallas_call(
        divisor_kernel,
        out_shape=jax.ShapeDtypeStruct((1, b_pad), jnp.float32),
        grid=(b_pad // tb,),
        in_specs=[
            pl.BlockSpec((2, tb), lambda i: (0, i)),   # x tile, batch on lanes
            const((20, 2)),
            const((20, 1)),
            const((20, 1)),
            const((1, 1)),
        ],
        out_specs=pl.BlockSpec((1, tb), lambda i: (0, i)),
        compiler_params=pltpu.CompilerParams(
            dimension_semantics=("parallel",),         # 2-TC sharding on v7x
        ),
    )(xt, w1_k, b1_k, w2_k, b2_k)

    return out[0, :B].reshape(B, 1)


def init_params(key):
    # nn.Linear-style U(-1/sqrt(fan_in), 1/sqrt(fan_in)), PyTorch layouts.
    k1, k2, k3, k4 = jax.random.split(key, 4)
    bound1 = 1.0 / jnp.sqrt(2.0)
    bound2 = 1.0 / jnp.sqrt(20.0)
    w1 = jax.random.uniform(k1, (20, 2), jnp.float32, -bound1, bound1)
    b1 = jax.random.uniform(k2, (20,), jnp.float32, -bound1, bound1)
    w2 = jax.random.uniform(k3, (1, 20), jnp.float32, -bound2, bound2)
    b2 = jax.random.uniform(k4, (1,), jnp.float32, -bound2, bound2)
    return w1, b1, w2, b2


if __name__ == "__main__":
    key = jax.random.PRNGKey(0)
    kx, kp = jax.random.split(key)

    # NOTE: for a batch this small plain XLA fusion beats any custom kernel;
    # the Pallas path pays off once B is in the thousands. Kept small here
    # purely as a correctness test.
    B = 8
    x = jax.random.normal(kx, (B, 2), dtype=jnp.float32)
    w1, b1, w2, b2 = init_params(kp)

    out = divisor_forward(x, w1, b1, w2, b2)
    jax.block_until_ready(out)

    # Reference: PyTorch semantics y = tanh(x @ W1.T + b1) @ W2.T + b2
    ref = jnp.tanh(x @ w1.T + b1) @ w2.T + b2
    assert out.shape == (B, 1)
    assert jnp.allclose(out, ref, atol=1e-5, rtol=1e-5)

    print("KERNEL_OK")
</pallas_src>

<mosaic_0001>
module attributes {stable_mosaic.version = 11 : i64} {
  func.func @divisor_kernel(%arg0: i32, %arg1: memref<2x128xf32, #tpu.memory_space<vmem>>, %arg2: memref<20x2xf32, #tpu.memory_space<vmem>>, %arg3: memref<20x1xf32, #tpu.memory_space<vmem>>, %arg4: memref<20x1xf32, #tpu.memory_space<vmem>>, %arg5: memref<1x1xf32, #tpu.memory_space<vmem>>, %arg6: memref<1x128xf32, #tpu.memory_space<vmem>>) attributes {dimension_semantics = [#tpu.dimension_semantics<parallel>], iteration_bounds = array<i64: 1>, scalar_prefetch = 0 : i64, scratch_operands = 0 : i64, tpu.core_type = #tpu.core_type<tc>, window_params = [{transform_indices = @transform_0, window_bounds = array<i64: 2, 128>}, {pipeline_mode = #tpu.pipeline_mode<synchronous>, transform_indices = @transform_1, window_bounds = array<i64: 20, 2>}, {pipeline_mode = #tpu.pipeline_mode<synchronous>, transform_indices = @transform_2, window_bounds = array<i64: 20, 1>}, {pipeline_mode = #tpu.pipeline_mode<synchronous>, transform_indices = @transform_3, window_bounds = array<i64: 20, 1>}, {pipeline_mode = #tpu.pipeline_mode<synchronous>, transform_indices = @transform_4, window_bounds = array<i64: 1, 1>}, {transform_indices = @transform_5, window_bounds = array<i64: 1, 128>}]} {
    %c0 = arith.constant 0 : index
    %c0_0 = arith.constant 0 : index
    %0 = vector.load %arg1[%c0, %c0_0] : memref<2x128xf32, #tpu.memory_space<vmem>>, vector<2x128xf32>
    %c0_1 = arith.constant 0 : index
    %c0_2 = arith.constant 0 : index
    %1 = vector.load %arg2[%c0_1, %c0_2] : memref<20x2xf32, #tpu.memory_space<vmem>>, vector<20x2xf32>
    %2 = vector.extract_strided_slice %1 {offsets = [0, 0], sizes = [20, 1], strides = [1, 1]} : vector<20x2xf32> to vector<20x1xf32>
    %3 = vector.extract_strided_slice %0 {offsets = [0, 0], sizes = [1, 128], strides = [1, 1]} : vector<2x128xf32> to vector<1x128xf32>
    %4 = vector.broadcast %2 : vector<20x1xf32> to vector<20x128xf32>
    %5 = vector.broadcast %3 : vector<1x128xf32> to vector<20x128xf32>
    %6 = arith.mulf %4, %5 : vector<20x128xf32>
    %7 = vector.extract_strided_slice %1 {offsets = [0, 1], sizes = [20, 1], strides = [1, 1]} : vector<20x2xf32> to vector<20x1xf32>
    %8 = vector.extract_strided_slice %0 {offsets = [1, 0], sizes = [1, 128], strides = [1, 1]} : vector<2x128xf32> to vector<1x128xf32>
    %9 = vector.broadcast %7 : vector<20x1xf32> to vector<20x128xf32>
    %10 = vector.broadcast %8 : vector<1x128xf32> to vector<20x128xf32>
    %11 = arith.mulf %9, %10 : vector<20x128xf32>
    %12 = arith.addf %6, %11 : vector<20x128xf32>
    %c0_3 = arith.constant 0 : index
    %c0_4 = arith.constant 0 : index
    %13 = vector.load %arg3[%c0_3, %c0_4] : memref<20x1xf32, #tpu.memory_space<vmem>>, vector<20x1xf32>
    %14 = vector.broadcast %13 : vector<20x1xf32> to vector<20x128xf32>
    %15 = arith.addf %12, %14 : vector<20x128xf32>
    %16 = math.tanh %15 : vector<20x128xf32>
    %c0_5 = arith.constant 0 : index
    %c0_6 = arith.constant 0 : index
    %17 = vector.load %arg4[%c0_5, %c0_6] : memref<20x1xf32, #tpu.memory_space<vmem>>, vector<20x1xf32>
    %18 = vector.broadcast %17 : vector<20x1xf32> to vector<20x128xf32>
    %19 = arith.mulf %18, %16 : vector<20x128xf32>
    %cst = arith.constant dense<0.000000e+00> : vector<128xf32>
    %20 = vector.multi_reduction <add>, %19, %cst [0] : vector<20x128xf32> to vector<128xf32>
    %21 = vector.shape_cast %20 : vector<128xf32> to vector<1x128xf32>
    %c0_7 = arith.constant 0 : index
    %c0_8 = arith.constant 0 : index
    %22 = vector.load %arg5[%c0_7, %c0_8] : memref<1x1xf32, #tpu.memory_space<vmem>>, vector<1x1xf32>
    %23 = vector.broadcast %22 : vector<1x1xf32> to vector<1x128xf32>
    %24 = arith.addf %21, %23 : vector<1x128xf32>
    %c0_9 = arith.constant 0 : index
    %c0_10 = arith.constant 0 : index
    %25 = vector.load %arg6[%c0_9, %c0_10] : memref<1x128xf32, #tpu.memory_space<vmem>>, vector<1x128xf32>
    tpu.vector_store %arg6[%c0_9, %c0_10], %24 {strides = array<i32>} : memref<1x128xf32, #tpu.memory_space<vmem>>, vector<1x128xf32>,
    return
  }
  func.func @transform_0(%arg0: i32) -> (i32, i32) {
    %c0_i32 = arith.constant 0 : i32
    %c0_i32_0 = arith.constant 0 : i32
    return %c0_i32, %arg0 : i32, i32
  }
  func.func @transform_1(%arg0: i32) -> (i32, i32) {
    %c0_i32 = arith.constant 0 : i32
    %c0_i32_0 = arith.constant 0 : i32
    %c0_i32_1 = arith.constant 0 : i32
    return %c0_i32, %c0_i32_0 : i32, i32
  }
  func.func @transform_2(%arg0: i32) -> (i32, i32) {
    %c0_i32 = arith.constant 0 : i32
    %c0_i32_0 = arith.constant 0 : i32
    %c0_i32_1 = arith.constant 0 : i32
    return %c0_i32, %c0_i32_0 : i32, i32
  }
  func.func @transform_3(%arg0: i32) -> (i32, i32) {
    %c0_i32 = arith.constant 0 : i32
    %c0_i32_0 = arith.constant 0 : i32
    %c0_i32_1 = arith.constant 0 : i32
    return %c0_i32, %c0_i32_0 : i32, i32
  }
  func.func @transform_4(%arg0: i32) -> (i32, i32) {
    %c0_i32 = arith.constant 0 : i32
    %c0_i32_0 = arith.constant 0 : i32
    %c0_i32_1 = arith.constant 0 : i32
    return %c0_i32, %c0_i32_0 : i32, i32
  }
  func.func @transform_5(%arg0: i32) -> (i32, i32) {
    %c0_i32 = arith.constant 0 : i32
    %c0_i32_0 = arith.constant 0 : i32
    return %c0_i32, %arg0 : i32, i32
  }
}

</mosaic_0001>

<llo_original>
// kernel: tpu_custom_call.1
$region0: #{tpu_custom_call.1}
  #allocation0 [shape = 'u32[]', space=smem, size = 0x4, offset = 0x4, fixed_abs, tag = 'smem constant byte address 0x4 - core index']
  #allocation1 [shape = 'u32[144,128]{1,0:T(1,128)}', space=vmem, size = 0x12000, scoped, tag = 'internal scratch']
  #allocation2 [shape = 'f32[1,1]{1,0:T(1,128)S(1)}', space=vmem, size = 0x200, scoped, tag = 'scoped memory for tpu_custom_call.1']
  %s0 = inlined_call_operand.vmem [shape: f32[2,128], index: 0, kind: input, shape index: {}]
  %s1 = inlined_call_operand.vmem [shape: f32[20,2], index: 1, kind: input, shape index: {}]
  %s2 = inlined_call_operand.vmem [shape: f32[20,1], index: 2, kind: input, shape index: {}]
  %s3 = inlined_call_operand.vmem [shape: f32[20,1], index: 3, kind: input, shape index: {}]
  %s4 = inlined_call_operand.<no memory space> [shape: f32[1,1], index: 4, kind: input, shape index: {}]
  %s5 = inlined_call_operand.hbm [shape: f32[1,128], index: 5, kind: output, shape index: {}]
  %s6 = sld [smem:[#allocation0]]
  $region30: #{tpu_custom_call.1} parent=0
    _
  %s8 = ssub.s32 1, %s6
  %s9 = scalar_select 0, %s8, %s6
  %v10 = vstv %s4
  %11 = vst [vmem:[#allocation2] sm:$0x1] %v10
  $region1: #{tpu_custom_call.1} parent=0
    #allocation3 [shape = 'u8[512]{0}', space=vmem, size = 0x400, scoped, tag = 'output window, operand 0, single buffered']
    #allocation4 [shape = 's32[1]{0}', space=sflag, size = 0x4, scoped, tag = 'scoped memory for tpu_custom_call.1']
    %12 = vsyncpa [#allocation4], 0
    // Predicated region
    $region2: #{tpu_custom_call.1} parent=1 // pred_check
      _
    $region3: #{tpu_custom_call.1} parent=1 // pred_check_branch
      %14 = sbr.rel (0) target = $region5
    $region4: #{tpu_custom_call.1} parent=1 // pred_region
      _
    $region5: #{tpu_custom_call.1} parent=1 // pred_fallthru
      _
    // Predicated region
    $region6: #{tpu_custom_call.1} parent=1 // pred_check
      _
    $region7: #{tpu_custom_call.1} parent=1 // pred_check_branch
      %16 = sbr.rel (0) target = $region9
    $region8: #{tpu_custom_call.1} parent=1 // pred_region
      _
    $region9: #{tpu_custom_call.1} parent=1 // pred_fallthru
      _
    // Predicated region
    $region10: #{tpu_custom_call.1} parent=1 // pred_check
      _
    $region11: #{tpu_custom_call.1} parent=1 // pred_check_branch
      %18 = sbr.rel (0) target = $region13
    $region12: #{tpu_custom_call.1} parent=1 // pred_region
      _
    $region13: #{tpu_custom_call.1} parent=1 // pred_fallthru
      _
    // Predicated region
    $region14: #{tpu_custom_call.1} parent=1 // pred_check
      _
    $region15: #{tpu_custom_call.1} parent=1 // pred_check_branch
      %20 = sbr.rel (0) target = $region17
    $region16: #{tpu_custom_call.1} parent=1 // pred_region
      _
    $region17: #{tpu_custom_call.1} parent=1 // pred_fallthru
      _
    // Predicated region
    $region18: #{tpu_custom_call.1} parent=1 // pred_check
      _
    $region19: #{tpu_custom_call.1} parent=1 // pred_check_branch
      %22 = sbr.rel (0) target = $region21
    $region20: #{tpu_custom_call.1} parent=1 // pred_region
      _
    $region21: #{tpu_custom_call.1} parent=1 // pred_fallthru
      _
    %v23 = vld [vmem:[%s0] sm:$0x3]
    %v24 = vld [vmem:[%s1] sm:$0xff]
    %v25 = vld [vmem:[%s1 + $0x8] sm:$0xff]
    %v26 = vld [vmem:[%s1 + $0x10] sm:$0xf]
    %28 = vset.pattern.permute.xlu0 0
    %29 = vperm.xlu0 %28, %v24
    %v30 = vpop.permute.xlu0 %29
    %33 = vset.pattern.permute.xlu0 0
    %34 = vperm.xlu0 %33, %v25
    %v35 = vpop.permute.xlu0 %34
    %38 = vset.pattern.permute.xlu0 0
    %39 = vperm.xlu0 %38, %v26
    %v40 = vpop.permute.xlu0 %39
    %v42 = vlaneseq
    %v43 = vshrl.u32 %v42, 7
    %v44 = vsub.s32 0, %v43
    %v45 = vrot.slane %v23, %v44
    %v46 = vmul.f32 %v30, %v45
    %v47 = vmul.f32 %v35, %v45
    %v48 = vmul.f32 %v40, %v45
    %49 = vset.pattern.permute.xlu0 1
    %50 = vperm.xlu0 %49, %v24
    %v51 = vpop.permute.xlu0 %50
    %53 = vset.pattern.permute.xlu0 1
    %54 = vperm.xlu0 %53, %v25
    %v55 = vpop.permute.xlu0 %54
    %57 = vset.pattern.permute.xlu0 1
    %58 = vperm.xlu0 %57, %v26
    %v59 = vpop.permute.xlu0 %58
    %v61 = vlaneseq
    %v62 = vshrl.u32 %v61, 7
    %v63 = vsub.s32 1, %v62
    %v64 = vrot.slane %v23, %v63
    %v65 = vmul.f32 %v51, %v64
    %v66 = vmul.f32 %v55, %v64
    %v67 = vmul.f32 %v59, %v64
    %v68 = vadd.f32 %v46, %v65
    %v69 = vadd.f32 %v47, %v66
    %v70 = vadd.f32 %v48, %v67
    %v71 = vld [vmem:[%s2] sm:$0xff]
    %v72 = vld [vmem:[%s2 + $0x8] sm:$0xff]
    %v73 = vld [vmem:[%s2 + $0x10] sm:$0xf]
    %75 = vset.pattern.permute.xlu0 0
    %76 = vperm.xlu0 %75, %v71
    %v77 = vpop.permute.xlu0 %76
    %80 = vset.pattern.permute.xlu0 0
    %81 = vperm.xlu0 %80, %v72
    %v82 = vpop.permute.xlu0 %81
    %85 = vset.pattern.permute.xlu0 0
    %86 = vperm.xlu0 %85, %v73
    %v87 = vpop.permute.xlu0 %86
    %v89 = vadd.f32 %v68, %v77
    %v90 = vadd.f32 %v69, %v82
    %v91 = vadd.f32 %v70, %v87
    %v92 = vtanh.pop %v89
    %v93 = vtanh.pop %v90
    %v94 = vtanh.pop %v91
    %v95 = vld [vmem:[%s3] sm:$0xff]
    %v96 = vld [vmem:[%s3 + $0x8] sm:$0xff]
    %v97 = vld [vmem:[%s3 + $0x10] sm:$0xf]
    %99 = vset.pattern.permute.xlu0 0
    %100 = vperm.xlu0 %99, %v95
    %v101 = vpop.permute.xlu0 %100
    %104 = vset.pattern.permute.xlu0 0
    %105 = vperm.xlu0 %104, %v96
    %v106 = vpop.permute.xlu0 %105
    %109 = vset.pattern.permute.xlu0 0
    %110 = vperm.xlu0 %109, %v97
    %v111 = vpop.permute.xlu0 %110
    %v113 = vmul.f32 %v101, %v92
    %v114 = vmul.f32 %v106, %v93
    %v115 = vmul.f32 %v111, %v94
    %v116 = vadd.f32 %v113, %v114
    %vm117 = vcmask 1043456
    %v118 = vsel %vm117, %v115, 0.0
    %v119 = vadd.f32 %v116, %v118
    %v120 = vrot.slane %v119, 4
    %v121 = vadd.f32 %v119, %v120
    %v122 = vrot.slane %v121, 2
    %v123 = vadd.f32 %v121, %v122
    %v124 = vrot.slane %v123, 1
    %v125 = vadd.f32 %v123, %v124
    %v126 = vld [vmem:[#allocation2] sm:$0x1]
    %128 = vset.pattern.permute.xlu0 0
    %129 = vperm.xlu0 %128, %v126
    %v130 = vpop.permute.xlu0 %129
    %v132 = vlaneseq
    %v133 = vshrl.u32 %v132, 7
    %v134 = vsub.s32 0, %v133
    %v135 = vrot.slane %v130, %v134
    %v136 = vadd.f32 %v125, %v135
    %137 = vst [vmem:[#allocation3] sm:$0x1] %v136
    // Predicated region
    $region22: #{tpu_custom_call.1} parent=1 // pred_check
      _
    $region23: #{tpu_custom_call.1} parent=1 // pred_check_branch
      %139 = sbr.rel (0) target = $region25
    $region24: #{tpu_custom_call.1} parent=1 // pred_region
      %s141 = ssub.s32 16, 16
      %142 = vsyncadd [#allocation4], %s141
      %s144 = sshll.u32 [#allocation3], 4
      %s145 = int_to_ptr.vmem [resolvable:$true] %s144
      %147 = dma.vmem_to_hbm [thread:$0]  %s145, 16, %s5, [#allocation4]
    $region25: #{tpu_custom_call.1} parent=1 // pred_fallthru
      _
    // Predicated region
    $region26: #{tpu_custom_call.1} parent=1 // pred_check
      _
    $region27: #{tpu_custom_call.1} parent=1 // pred_check_branch
      %149 = sbr.rel (0) target = $region29
    $region28: #{tpu_custom_call.1} parent=1 // pred_region
      %150 = dma.done [#allocation4], 16
    $region29: #{tpu_custom_call.1} parent=1 // pred_fallthru
      _
    %151 = vsyncpa [#allocation4], 1

</llo_original>
